<compile_context>
chip_gen: v7x
topology: tpu7x:2x2x1
jax: 0.10.0
libtpu: 0.0.40
codegen_flags: <defaults>
</compile_context>

<pallas_src>
import functools

import jax
import jax.numpy as jnp
from jax.experimental import pallas as pl
from jax.experimental.pallas import tpu as pltpu  # noqa: F401  (TPU backend)


def _compute_gate_kernel(xh_ref, w_ref, cell_input_ref, input_gate_ref, *,
                         gate_cols):
    """Single fused step: one MXU matmul + two full-vreg EUP activations.

    xh_ref : (B, input_size + hidden_size + 1)  -- [x | h | 1]
    w_ref  : (input_size + hidden_size + 1, 2*cell_num*hidden_size)
             columns ordered as [all gate cols | all cell-state cols],
             last row is the bias (picked up by the ones column of xh).
    """
    net = jnp.dot(xh_ref[...], w_ref[...],
                  preferred_element_type=jnp.float32)        # (B, 2*C*H)

    # Slice at a clean 128-lane boundary (gate_cols == cell_num*hidden_size).
    input_gate_ref[...] = jax.nn.sigmoid(net[:, :gate_cols]).astype(
        input_gate_ref.dtype)
    cell_input_ref[...] = jnp.tanh(net[:, gate_cols:]).astype(
        cell_input_ref.dtype)


def compute_gate(input_word, hidden_states, wx, bx, wh):
    """Pallas implementation of Compute_Gate.forward.

    Returns (cell_input, input_gate), each of shape (B, cell_num, hidden_size).
    """
    batch, input_size = input_word.shape
    cell_num, _, two_h = wx.shape
    hidden_size = two_h // 2
    assert hidden_states.shape == (batch, hidden_size)
    assert wh.shape == (cell_num, hidden_size, two_h)
    assert bx.shape == (cell_num, two_h)

    gate_cols = cell_num * hidden_size            # column count of each slab
    n_cols = 2 * gate_cols                        # fused matmul N
    k_rows = input_size + hidden_size + 1         # fused matmul K (+1 = bias)

    # ---- wrapper-side layout plumbing (reshape/transpose/concat only) ------
    # Gate slab:  column index = c*H + h   (first gate_cols columns)
    # Cell slab:  column index = c*H + h   (last  gate_cols columns)
    wx_gate = jnp.transpose(wx[:, :, :hidden_size], (1, 0, 2)).reshape(
        input_size, gate_cols)
    wx_cell = jnp.transpose(wx[:, :, hidden_size:], (1, 0, 2)).reshape(
        input_size, gate_cols)
    wh_gate = jnp.transpose(wh[:, :, :hidden_size], (1, 0, 2)).reshape(
        hidden_size, gate_cols)
    wh_cell = jnp.transpose(wh[:, :, hidden_size:], (1, 0, 2)).reshape(
        hidden_size, gate_cols)
    bx_gate = bx[:, :hidden_size].reshape(1, gate_cols)
    bx_cell = bx[:, hidden_size:].reshape(1, gate_cols)

    w_all = jnp.concatenate(
        [jnp.concatenate([wx_gate, wx_cell], axis=1),
         jnp.concatenate([wh_gate, wh_cell], axis=1),
         jnp.concatenate([bx_gate, bx_cell], axis=1)],
        axis=0).astype(jnp.float32)               # (K, 2*C*H)

    xh = jnp.concatenate(
        [input_word, hidden_states, jnp.ones((batch, 1), jnp.float32)],
        axis=1).astype(jnp.float32)               # (B, K)

    kernel = functools.partial(_compute_gate_kernel, gate_cols=gate_cols)

    cost = pl.CostEstimate(
        flops=2 * batch * k_rows * n_cols,
        transcendentals=batch * n_cols,
        bytes_accessed=4 * (batch * k_rows + k_rows * n_cols + batch * n_cols),
    )

    # No grid: the whole problem is one fused (B, K) x (K, 2*C*H) matmul that
    # trivially fits VMEM at these sizes, so every ref is a full-array VMEM
    # block and there is zero per-step pipeline overhead.
    cell_input_flat, input_gate_flat = pl.pallas_call(
        kernel,
        out_shape=(
            jax.ShapeDtypeStruct((batch, gate_cols), jnp.float32),
            jax.ShapeDtypeStruct((batch, gate_cols), jnp.float32),
        ),
        cost_estimate=cost,
    )(xh, w_all)

    cell_input = cell_input_flat.reshape(batch, cell_num, hidden_size)
    input_gate = input_gate_flat.reshape(batch, cell_num, hidden_size)
    return cell_input, input_gate


def reference_compute_gate(input_word, hidden_states, wx, bx, wh):
    """Pure-JAX reference matching the PyTorch forward."""
    hidden_size = wx.shape[-1] // 2
    net = (jnp.einsum('bi,cio->cbo', input_word, wx,
                      precision=jax.lax.Precision.HIGHEST)
           + jnp.einsum('bh,cho->cbo', hidden_states, wh,
                        precision=jax.lax.Precision.HIGHEST)
           + bx[:, None, :])
    net = jnp.transpose(net, (1, 0, 2))                      # (B, cell_num, 2H)
    input_gate = jax.nn.sigmoid(net[..., :hidden_size])
    cell_input = jnp.tanh(net[..., hidden_size:])
    return cell_input, input_gate


if __name__ == "__main__":
    # Small shapes consistent with the module's forward.
    batch = 8
    input_size = 16
    hidden_size = 32
    cell_num = 4

    key = jax.random.PRNGKey(0)
    k_x, k_h, k_wx, k_bx, k_wh = jax.random.split(key, 5)

    input_word = jax.random.normal(k_x, (batch, input_size), dtype=jnp.float32)
    hidden_states = jax.random.normal(k_h, (batch, hidden_size), dtype=jnp.float32)

    # Deterministic parameter init (nn.Linear-style uniform bounds).
    bound_x = 1.0 / (input_size ** 0.5)
    bound_h = 1.0 / (hidden_size ** 0.5)
    wx = jax.random.uniform(k_wx, (cell_num, input_size, 2 * hidden_size),
                            minval=-bound_x, maxval=bound_x, dtype=jnp.float32)
    bx = jax.random.uniform(k_bx, (cell_num, 2 * hidden_size),
                            minval=-bound_x, maxval=bound_x, dtype=jnp.float32)
    wh = jax.random.uniform(k_wh, (cell_num, hidden_size, 2 * hidden_size),
                            minval=-bound_h, maxval=bound_h, dtype=jnp.float32)

    cell_input, input_gate = compute_gate(input_word, hidden_states, wx, bx, wh)
    jax.block_until_ready((cell_input, input_gate))

    ref_cell_input, ref_input_gate = reference_compute_gate(
        input_word, hidden_states, wx, bx, wh)

    assert cell_input.shape == (batch, cell_num, hidden_size)
    assert input_gate.shape == (batch, cell_num, hidden_size)
    assert jnp.allclose(cell_input, ref_cell_input, atol=2e-5, rtol=2e-5)
    assert jnp.allclose(input_gate, ref_input_gate, atol=2e-5, rtol=2e-5)

    print("KERNEL_OK")
</pallas_src>

<mosaic_0001>
module attributes {stable_mosaic.version = 11 : i64} {
  func.func @_compute_gate_kernel(%arg0: memref<8x49xf32, #tpu.memory_space<vmem>>, %arg1: memref<49x256xf32, #tpu.memory_space<vmem>>, %arg2: memref<8x128xf32, #tpu.memory_space<vmem>>, %arg3: memref<8x128xf32, #tpu.memory_space<vmem>>) attributes {dimension_semantics = [], scalar_prefetch = 0 : i64, scratch_operands = 0 : i64, tpu.core_type = #tpu.core_type<tc>} {
    %c0 = arith.constant 0 : index
    %c0_0 = arith.constant 0 : index
    %0 = vector.load %arg0[%c0, %c0_0] : memref<8x49xf32, #tpu.memory_space<vmem>>, vector<8x49xf32>
    %c0_1 = arith.constant 0 : index
    %c0_2 = arith.constant 0 : index
    %1 = vector.load %arg1[%c0_1, %c0_2] : memref<49x256xf32, #tpu.memory_space<vmem>>, vector<49x256xf32>
    %cst = arith.constant dense<0.000000e+00> : vector<8x256xf32>
    %2 = tpu.matmul %0, %1, %cst {dimension_numbers = #tpu.dot_dimension_numbers<[1], [0], [0], [1], [0, 0, 1, 1], [], []>} : vector<8x49xf32>, vector<49x256xf32>, vector<8x256xf32> -> vector<8x256xf32>
    %3 = vector.extract_strided_slice %2 {offsets = [0, 0], sizes = [8, 128], strides = [1, 1]} : vector<8x256xf32> to vector<8x128xf32>
    %4 = arith.negf %3 : vector<8x128xf32>
    %5 = math.exp %4 : vector<8x128xf32>
    %cst_3 = arith.constant 1.000000e+00 : f32
    %6 = vector.broadcast %cst_3 : f32 to vector<8x128xf32>
    %7 = arith.addf %6, %5 : vector<8x128xf32>
    %8 = arith.divf %6, %7 : vector<8x128xf32>
    %c0_4 = arith.constant 0 : index
    %c0_5 = arith.constant 0 : index
    %9 = vector.load %arg3[%c0_4, %c0_5] : memref<8x128xf32, #tpu.memory_space<vmem>>, vector<8x128xf32>
    tpu.vector_store %arg3[%c0_4, %c0_5], %8 {strides = array<i32>} : memref<8x128xf32, #tpu.memory_space<vmem>>, vector<8x128xf32>,
    %10 = vector.extract_strided_slice %2 {offsets = [0, 128], sizes = [8, 128], strides = [1, 1]} : vector<8x256xf32> to vector<8x128xf32>
    %11 = math.tanh %10 : vector<8x128xf32>
    %c0_6 = arith.constant 0 : index
    %c0_7 = arith.constant 0 : index
    %12 = vector.load %arg2[%c0_6, %c0_7] : memref<8x128xf32, #tpu.memory_space<vmem>>, vector<8x128xf32>
    tpu.vector_store %arg2[%c0_6, %c0_7], %11 {strides = array<i32>} : memref<8x128xf32, #tpu.memory_space<vmem>>, vector<8x128xf32>,
    return
  }
}

</mosaic_0001>

<llo_original>
// kernel: tpu_custom_call.1
$region0: #{tpu_custom_call.1}
  #allocation0 [shape = 'u32[]', space=smem, size = 0x4, offset = 0x4, fixed_abs, tag = 'smem constant byte address 0x4 - core index']
  #allocation1 [shape = 'u32[144,128]{1,0:T(1,128)}', space=vmem, size = 0x12000, scoped, tag = 'internal scratch']
  %s0 = inlined_call_operand.hbm [shape: f32[8,49], index: 0, kind: input, shape index: {}]
  %s1 = inlined_call_operand.hbm [shape: f32[49,256], index: 1, kind: input, shape index: {}]
  %s2 = inlined_call_operand.hbm [shape: f32[8,128], index: 2, kind: output, shape index: {0}]
  %s3 = inlined_call_operand.hbm [shape: f32[8,128], index: 3, kind: output, shape index: {1}]
  %4 = xla_tuple %s2, %s3
  %s5 = sld [smem:[#allocation0]]
  $region34: #{tpu_custom_call.1} parent=0
    _
  %s7 = ssub.s32 1, %s5
  %s8 = scalar_select 0, %s7, %s5
  $region1: #{tpu_custom_call.1} parent=0
    #allocation2 [shape = 'u8[4096]{0}', space=vmem, size = 0x1000, scoped, tag = 'input window, operand 0, single buffered']
    #allocation3 [shape = 's32[1]{0}', space=sflag, size = 0x4, scoped, tag = 'scoped memory for tpu_custom_call.1']
    #allocation4 [shape = 's32[1]{0}', space=sflag, size = 0x4, scoped, tag = 'scoped memory for tpu_custom_call.1']
    #allocation5 [shape = 'u8[57344]{0}', space=vmem, size = 0xe000, scoped, tag = 'input window, operand 1, single buffered']
    #allocation6 [shape = 's32[1]{0}', space=sflag, size = 0x4, scoped, tag = 'scoped memory for tpu_custom_call.1']
    #allocation7 [shape = 'u8[4096]{0}', space=vmem, size = 0x1000, scoped, tag = 'output window, operand 0, single buffered']
    #allocation8 [shape = 'u8[4096]{0}', space=vmem, size = 0x1000, scoped, tag = 'output window, operand 1, single buffered']
    #allocation9 [shape = 's32[1]{0}', space=sflag, size = 0x4, scoped, tag = 'scoped memory for tpu_custom_call.1']
    %9 = vsyncpa [#allocation3], 0
    %10 = vsyncpa [#allocation6], 0
    %11 = vsyncpa [#allocation4], 0
    %12 = vsyncpa [#allocation9], 0
    // Predicated region
    $region2: #{tpu_custom_call.1} parent=1 // pred_check
      _
    $region3: #{tpu_custom_call.1} parent=1 // pred_check_branch
      %14 = sbr.rel (0) target = $region5
    $region4: #{tpu_custom_call.1} parent=1 // pred_region
      %s16 = ssub.s32 128, 128
      %17 = vsyncadd [#allocation3], %s16
      %s19 = sshll.u32 [#allocation2], 4
      %s20 = int_to_ptr.vmem [resolvable:$true] %s19
      %22 = dma.hbm_to_vmem [thread:$0]  %s0, 128, %s20, [#allocation3]
    $region5: #{tpu_custom_call.1} parent=1 // pred_fallthru
      _
    // Predicated region
    $region6: #{tpu_custom_call.1} parent=1 // pred_check
      _
    $region7: #{tpu_custom_call.1} parent=1 // pred_check_branch
      %24 = sbr.rel (0) target = $region9
    $region8: #{tpu_custom_call.1} parent=1 // pred_region
      %s26 = ssub.s32 1792, 1792
      %27 = vsyncadd [#allocation6], %s26
      %s28 = sshll.u32 [#allocation5], 4
      %s29 = int_to_ptr.vmem [resolvable:$true] %s28
      %34 = dma.hbm_to_vmem [thread:$0]  %s1, 1792, %s29, [#allocation6], 256, 256, 16
    $region9: #{tpu_custom_call.1} parent=1 // pred_fallthru
      _
    // Predicated region
    $region10: #{tpu_custom_call.1} parent=1 // pred_check
      _
    $region11: #{tpu_custom_call.1} parent=1 // pred_check_branch
      %36 = sbr.rel (0) target = $region13
    $region12: #{tpu_custom_call.1} parent=1 // pred_region
      %37 = dma.done [#allocation3], 128
    $region13: #{tpu_custom_call.1} parent=1 // pred_fallthru
      _
    // Predicated region
    $region14: #{tpu_custom_call.1} parent=1 // pred_check
      _
    $region15: #{tpu_custom_call.1} parent=1 // pred_check_branch
      %39 = sbr.rel (0) target = $region17
    $region16: #{tpu_custom_call.1} parent=1 // pred_region
      %40 = dma.done [#allocation6], 1792
    $region17: #{tpu_custom_call.1} parent=1 // pred_fallthru
      _
    %v41 = vld [vmem:[#allocation2] sm:$0xff]
    %v42 = vld [vmem:[#allocation5] sm:$0xff]
    %v43 = vld [vmem:[#allocation5 + $0x8] sm:$0xff]
    %v44 = vld [vmem:[#allocation5 + $0x10] sm:$0xff]
    %v45 = vld [vmem:[#allocation5 + $0x18] sm:$0xff]
    %v46 = vld [vmem:[#allocation5 + $0x20] sm:$0xff]
    %v47 = vld [vmem:[#allocation5 + $0x28] sm:$0xff]
    %v48 = vld [vmem:[#allocation5 + $0x30] sm:$0xff]
    %v49 = vld [vmem:[#allocation5 + $0x38] sm:$0xff]
    %v50 = vld [vmem:[#allocation5 + $0x40] sm:$0xff]
    %v51 = vld [vmem:[#allocation5 + $0x48] sm:$0xff]
    %v52 = vld [vmem:[#allocation5 + $0x50] sm:$0xff]
    %v53 = vld [vmem:[#allocation5 + $0x58] sm:$0xff]
    %v54 = vld [vmem:[#allocation5 + $0x60] sm:$0x1]
    %v55 = vld [vmem:[#allocation5 + $0x68] sm:$0x1]
    %vm56 = vcmask 400384
    %v58 = vsel %vm56, %v41, 0
    %vm60 = vcmask 1040384
    %v62 = vsel %vm60, %v54, 0
    %v65 = vsel %vm60, %v55, 0
    %67 = vmatprep.subr.mxu0 %v43
    %68 = vmatpush1.msra.mxu0 %v42
    %69 = vmatprep.subr.mxu0 %v45
    %70 = vmatpush1.msra.mxu0 %v44
    %71 = vmatprep.subr.mxu0 %v47
    %72 = vmatpush1.msra.mxu0 %v46
    %73 = vmatprep.subr.mxu0 %v49
    %74 = vmatpush1.msra.mxu0 %v48
    %75 = vmatprep.subr.mxu0 %v51
    %76 = vmatpush1.msra.mxu0 %v50
    %77 = vmatprep.subr.mxu0 %v53
    %78 = vmatpush1.msra.mxu0 %v52
    %79 = vmatprep.subr.mxu0 %v65
    %80 = vmatpush1.msra.mxu0 %v62
    %81 = vmatprep.subr.mxu0 0.0
    %82 = vmatpush1.msra.mxu0 0.0
    %83 = vmatprep.subr.mxu0 0.0
    %84 = vmatpush1.msra.mxu0 0.0
    %85 = vmatprep.subr.mxu0 0.0
    %86 = vmatpush1.msra.mxu0 0.0
    %87 = vmatprep.subr.mxu0 0.0
    %88 = vmatpush1.msra.mxu0 0.0
    %89 = vmatprep.subr.mxu0 0.0
    %90 = vmatpush1.msra.mxu0 0.0
    %91 = vmatprep.subr.mxu0 0.0
    %92 = vmatpush1.msra.mxu0 0.0
    %93 = vmatprep.subr.mxu0 0.0
    %94 = vmatpush1.msra.mxu0 0.0
    %95 = vmatprep.subr.mxu0 0.0
    %96 = vmatpush1.msra.mxu0 0.0
    %97 = vmatprep.subr.mxu0 0.0
    %98 = vmatpush1.msra.mxu0 0.0
    %99 = vmatprep.subr.mxu0 0.0
    %100 = vmatpush1.msra.mxu0 0.0
    %101 = vmatprep.subr.mxu0 0.0
    %102 = vmatpush1.msra.mxu0 0.0
    %103 = vmatprep.subr.mxu0 0.0
    %104 = vmatpush1.msra.mxu0 0.0
    %105 = vmatprep.subr.mxu0 0.0
    %106 = vmatpush1.msra.mxu0 0.0
    %107 = vmatprep.subr.mxu0 0.0
    %108 = vmatpush1.msra.mxu0 0.0
    %109 = vmatprep.subr.mxu0 0.0
    %110 = vmatpush1.msra.mxu0 0.0
    %111 = vmatprep.subr.mxu0 0.0
    %112 = vmatpush1.msra.mxu0 0.0
    %113 = vmatprep.subr.mxu0 0.0
    %114 = vmatpush1.msra.mxu0 0.0
    %115 = vmatprep.subr.mxu0 0.0
    %116 = vmatpush1.msra.mxu0 0.0
    %117 = vmatprep.subr.mxu0 0.0
    %118 = vmatpush1.msra.mxu0 0.0
    %119 = vmatprep.subr.mxu0 0.0
    %120 = vmatpush1.msra.mxu0 0.0
    %121 = vmatprep.subr.mxu0 0.0
    %122 = vmatpush1.msra.mxu0 0.0
    %123 = vmatprep.subr.mxu0 0.0
    %124 = vmatpush1.msra.mxu0 0.0
    %125 = vmatprep.subr.mxu0 0.0
    %126 = vmatpush1.msra.mxu0 0.0
    %127 = vmatprep.subr.mxu0 0.0
    %128 = vmatpush1.msra.mxu0 0.0
    %129 = vmatprep.subr.mxu0 0.0
    %130 = vmatpush1.msra.mxu0 0.0
    %131 = vmatprep.mubr.f32.mxu0 0.0
    %132 = vmatmul.mubr.f32.gmra.mrb[0].mxu0 %v58
    %v133 = vpop.f32.mrb[0].mxu0
    %v134 = vadd.f32 0.0, %v133
    %v135 = vpop.f32.mrb[0].mxu0
    %v136 = vadd.f32 0.0, %v135
    %137 = vdwg.mxu0
    %v138 = vxor.u32 %v134, 2147483648
    %v139 = vmul.f32 %v138, 1.442695
    %v140 = vpow.pop %v139
    %v141 = vadd.f32 %v140, 1.0
    %v142 = vrcp.pop %v141
    %v143 = vmul.f32 1.0, %v142
    %144 = vst [vmem:[#allocation8] sm:$0xff] %v143
    %v145 = vtanh.pop %v136
    %146 = vst [vmem:[#allocation7] sm:$0xff] %v145
    // Predicated region
    $region18: #{tpu_custom_call.1} parent=1 // pred_check
      _
    $region19: #{tpu_custom_call.1} parent=1 // pred_check_branch
      %148 = sbr.rel (0) target = $region21
    $region20: #{tpu_custom_call.1} parent=1 // pred_region
      %s150 = ssub.s32 128, 128
      %151 = vsyncadd [#allocation4], %s150
      %s153 = sshll.u32 [#allocation7], 4
      %s154 = int_to_ptr.vmem [resolvable:$true] %s153
      %156 = dma.vmem_to_hbm [thread:$0]  %s154, 128, %s2, [#allocation4]
    $region21: #{tpu_custom_call.1} parent=1 // pred_fallthru
      _
    // Predicated region
    $region22: #{tpu_custom_call.1} parent=1 // pred_check
      _
    $region23: #{tpu_custom_call.1} parent=1 // pred_check_branch
      %158 = sbr.rel (0) target = $region25
    $region24: #{tpu_custom_call.1} parent=1 // pred_region
      %s160 = ssub.s32 128, 128
      %161 = vsyncadd [#allocation9], %s160
      %s163 = sshll.u32 [#allocation8], 4
      %s164 = int_to_ptr.vmem [resolvable:$true] %s163
      %166 = dma.vmem_to_hbm [thread:$0]  %s164, 128, %s3, [#allocation9]
    $region25: #{tpu_custom_call.1} parent=1 // pred_fallthru
      _
    // Predicated region
    $region26: #{tpu_custom_call.1} parent=1 // pred_check
      _
    $region27: #{tpu_custom_call.1} parent=1 // pred_check_branch
      %168 = sbr.rel (0) target = $region29
    $region28: #{tpu_custom_call.1} parent=1 // pred_region
      %169 = dma.done [#allocation4], 128
    $region29: #{tpu_custom_call.1} parent=1 // pred_fallthru
      _
    // Predicated region
    $region30: #{tpu_custom_call.1} parent=1 // pred_check
      _
    $region31: #{tpu_custom_call.1} parent=1 // pred_check_branch
      %171 = sbr.rel (0) target = $region33
    $region32: #{tpu_custom_call.1} parent=1 // pred_region
      %172 = dma.done [#allocation9], 128
    $region33: #{tpu_custom_call.1} parent=1 // pred_fallthru
      _
    %173 = vsyncpa [#allocation3], 1
    %174 = vsyncpa [#allocation6], 1
    %175 = vsyncpa [#allocation4], 1
    %176 = vsyncpa [#allocation9], 1

</llo_original>
